<compile_context>
chip_gen: v7x
topology: tpu7x:2x2x1
jax: 0.10.0
libtpu: 0.0.40
codegen_flags: <defaults>
</compile_context>

<pallas_src>
import functools
import math

import jax
import jax.numpy as jnp
from jax.experimental import pallas as pl
from jax.experimental.pallas import tpu as pltpu


VMEM_BUDGET = 40 * 1024 * 1024      # whole-K admission budget (fits v7x 64 MiB)
VMEM_LIMIT = 48 * 1024 * 1024       # explicit scoped-VMEM limit for matmul calls


def _round_up(x, m):
    return ((x + m - 1) // m) * m


def _pick_tm(mp):
    """Largest power-of-two tile (<=256, >=8) dividing mp (mp % 8 == 0)."""
    t = 256
    while t > 8 and (t > mp or mp % t != 0):
        t //= 2
    return min(t, mp)


# ----------------------------------------------------------------------------
# Pallas kernels
# ----------------------------------------------------------------------------
def _epilogue(acc, bias, res, relu, res_mode):
    out = acc + bias
    if res is not None and res_mode == "pre_relu":
        out = out + res
    if relu:
        out = jnp.maximum(out, 0.0)
    if res is not None and res_mode == "post":
        out = out + res
    if res is not None and res_mode == "mul":
        out = out * res
    return out


def _mm_kernel_1k(a_ref, b_ref, bias_ref, o_ref, *, relu, res_mode):
    acc = jnp.dot(a_ref[...], b_ref[...], preferred_element_type=jnp.float32)
    o_ref[...] = _epilogue(acc, bias_ref[...], None, relu, res_mode
                           ).astype(o_ref.dtype)


def _mm_res_kernel_1k(a_ref, b_ref, bias_ref, r_ref, o_ref, *, relu, res_mode):
    acc = jnp.dot(a_ref[...], b_ref[...], preferred_element_type=jnp.float32)
    res = r_ref[...].astype(jnp.float32)
    o_ref[...] = _epilogue(acc, bias_ref[...], res, relu, res_mode
                           ).astype(o_ref.dtype)


def _mm_kernel(a_ref, b_ref, bias_ref, o_ref, acc_ref, *, relu, res_mode):
    @pl.when(pl.program_id(2) == 0)
    def _():
        acc_ref[...] = jnp.zeros_like(acc_ref)

    acc_ref[...] += jnp.dot(a_ref[...], b_ref[...],
                            preferred_element_type=jnp.float32)

    @pl.when(pl.program_id(2) == pl.num_programs(2) - 1)
    def _():
        o_ref[...] = _epilogue(acc_ref[...], bias_ref[...], None, relu,
                               res_mode).astype(o_ref.dtype)


def _mm_res_kernel(a_ref, b_ref, bias_ref, r_ref, o_ref, acc_ref, *,
                   relu, res_mode):
    @pl.when(pl.program_id(2) == 0)
    def _():
        acc_ref[...] = jnp.zeros_like(acc_ref)

    acc_ref[...] += jnp.dot(a_ref[...], b_ref[...],
                            preferred_element_type=jnp.float32)

    @pl.when(pl.program_id(2) == pl.num_programs(2) - 1)
    def _():
        res = r_ref[...].astype(jnp.float32)
        o_ref[...] = _epilogue(acc_ref[...], bias_ref[...], res, relu,
                               res_mode).astype(o_ref.dtype)


def _mm_vmem_bytes(tm, tn, tk, has_res):
    b = 2 * tm * tk * 2          # A, double-buffered bf16
    b += 2 * tk * tn * 2         # B, double-buffered bf16
    b += tm * tn * 4             # f32 accumulator (worst case)
    b += 2 * tm * tn * 2         # output, double-buffered bf16
    b += 2 * tn * 4              # bias
    if has_res:
        b += 2 * tm * tn * 2
    return b


def _plan_mm(mp, kp, n, has_res):
    tm = _pick_tm(mp)
    if n <= 128:
        tn = n                                   # full-dim lane block
    elif n % 256 == 0:
        tn = 256
    else:
        tn = 128
    if _mm_vmem_bytes(tm, tn, kp, has_res) <= VMEM_BUDGET:
        return tm, tn, kp                        # whole-K, single grid step
    for tk in (512, 256, 128):
        if kp % tk == 0 and _mm_vmem_bytes(tm, tn, tk, has_res) <= VMEM_BUDGET:
            return tm, tn, tk
    return tm, tn, 128


def _matmul_bias(a, b, bias, *, relu, res=None, res_mode="pre_relu",
                 out_dtype=jnp.bfloat16):
    """out = epilogue(a @ b + bias [, res]) on the MXU, f32 accumulation.

    a: (mp, kp) bf16, mp % 8 == 0; kp % 128 == 0 or kp == full K
    b: (kp, n)  bf16
    bias: (1, n) f32 (BN scale already folded into b's columns)
    res:  optional (mp, n) residual fused in the epilogue.
    """
    mp, kp = a.shape
    n = b.shape[1]
    has_res = res is not None
    tm, tn, tk = _plan_mm(mp, kp, n, has_res)
    single_k = (tk == kp)

    if single_k:
        grid = (mp // tm, n // tn)
        cparams = pltpu.CompilerParams(
            dimension_semantics=("parallel", "parallel"),
            vmem_limit_bytes=VMEM_LIMIT)
        a_spec = pl.BlockSpec((tm, kp), lambda i, j: (i, 0))
        b_spec = pl.BlockSpec((kp, tn), lambda i, j: (0, j))
        bias_spec = pl.BlockSpec((1, tn), lambda i, j: (0, j))
        o_spec = pl.BlockSpec((tm, tn), lambda i, j: (i, j))
        if has_res:
            r_spec = pl.BlockSpec((tm, tn), lambda i, j: (i, j))
            return pl.pallas_call(
                functools.partial(_mm_res_kernel_1k, relu=relu,
                                  res_mode=res_mode),
                out_shape=jax.ShapeDtypeStruct((mp, n), out_dtype),
                grid_spec=pltpu.PrefetchScalarGridSpec(
                    num_scalar_prefetch=0, grid=grid,
                    in_specs=[a_spec, b_spec, bias_spec, r_spec],
                    out_specs=o_spec),
                compiler_params=cparams,
            )(a, b, bias, res)
        return pl.pallas_call(
            functools.partial(_mm_kernel_1k, relu=relu, res_mode=res_mode),
            out_shape=jax.ShapeDtypeStruct((mp, n), out_dtype),
            grid_spec=pltpu.PrefetchScalarGridSpec(
                num_scalar_prefetch=0, grid=grid,
                in_specs=[a_spec, b_spec, bias_spec],
                out_specs=o_spec),
            compiler_params=cparams,
        )(a, b, bias)

    # Tiled-K fallback (K grid last, f32 scratch accumulator).
    grid = (mp // tm, n // tn, kp // tk)
    cparams = pltpu.CompilerParams(
        dimension_semantics=("parallel", "parallel", "arbitrary"),
        vmem_limit_bytes=VMEM_LIMIT)
    a_spec = pl.BlockSpec((tm, tk), lambda i, j, k: (i, k))
    b_spec = pl.BlockSpec((tk, tn), lambda i, j, k: (k, j))
    bias_spec = pl.BlockSpec((1, tn), lambda i, j, k: (0, j))
    o_spec = pl.BlockSpec((tm, tn), lambda i, j, k: (i, j))
    scratch = [pltpu.VMEM((tm, tn), jnp.float32)]
    if has_res:
        r_spec = pl.BlockSpec((tm, tn), lambda i, j, k: (i, j))
        return pl.pallas_call(
            functools.partial(_mm_res_kernel, relu=relu, res_mode=res_mode),
            out_shape=jax.ShapeDtypeStruct((mp, n), out_dtype),
            grid_spec=pltpu.PrefetchScalarGridSpec(
                num_scalar_prefetch=0, grid=grid,
                in_specs=[a_spec, b_spec, bias_spec, r_spec],
                out_specs=o_spec, scratch_shapes=scratch),
            compiler_params=cparams,
        )(a, b, bias, res)
    return pl.pallas_call(
        functools.partial(_mm_kernel, relu=relu, res_mode=res_mode),
        out_shape=jax.ShapeDtypeStruct((mp, n), out_dtype),
        grid_spec=pltpu.PrefetchScalarGridSpec(
            num_scalar_prefetch=0, grid=grid,
            in_specs=[a_spec, b_spec, bias_spec],
            out_specs=o_spec, scratch_shapes=scratch),
        compiler_params=cparams,
    )(a, b, bias)


def _head_kernel(a_ref, w_ref, bias_ref, o_ref, *, relu):
    a = a_ref[...].astype(jnp.float32)
    w = w_ref[...].astype(jnp.float32)
    out = jnp.sum(a * w, axis=-1, keepdims=True) + bias_ref[...]
    if relu:
        out = jnp.maximum(out, 0.0)
    o_ref[...] = out.astype(o_ref.dtype)


def _head_res_kernel(a_ref, w_ref, bias_ref, r_ref, o_ref, *, relu):
    a = a_ref[...].astype(jnp.float32)
    w = w_ref[...].astype(jnp.float32)
    out = jnp.sum(a * w, axis=-1, keepdims=True) + bias_ref[...]
    if relu:
        out = jnp.maximum(out, 0.0)
    o_ref[...] = (out + r_ref[...]).astype(o_ref.dtype)


def _matvec_head(a, w, bias, *, relu, res=None):
    """1-output-channel conv head: VPU multiply + cross-lane (XLU) reduce.

    Avoids padding N=1 up to a 128-lane MXU tile; optional residual (the RRU
    `+ crop_sal`) is fused into the epilogue in f32.
    """
    mp, kp = a.shape
    tm = _pick_tm(mp)
    if kp >= 1024:                      # bound f32 temporaries / vreg pressure
        tm = min(tm, 64)
    in_specs = [pl.BlockSpec((tm, kp), lambda i: (i, 0)),
                pl.BlockSpec((1, kp), lambda i: (0, 0)),
                pl.BlockSpec((1, 1), lambda i: (0, 0))]
    args = [a, w.reshape(1, kp), bias]
    kern = functools.partial(_head_kernel, relu=relu)
    if res is not None:
        in_specs.append(pl.BlockSpec((tm, 1), lambda i: (i, 0)))
        args.append(res.astype(jnp.float32))
        kern = functools.partial(_head_res_kernel, relu=relu)
    return pl.pallas_call(
        kern,
        out_shape=jax.ShapeDtypeStruct((mp, 1), jnp.float32),
        grid_spec=pltpu.PrefetchScalarGridSpec(
            num_scalar_prefetch=0, grid=(mp // tm,),
            in_specs=in_specs,
            out_specs=pl.BlockSpec((tm, 1), lambda i: (i, 0))),
        compiler_params=pltpu.CompilerParams(
            dimension_semantics=("parallel",),
            vmem_limit_bytes=VMEM_LIMIT),
    )(*args)


def _rev_att_kernel(s_ref, f_ref, o_ref):
    s = s_ref[...].astype(jnp.float32)
    sig = 1.0 / (1.0 + jnp.exp(-s))                     # exact f32 sigmoid
    o_ref[...] = ((1.0 - sig) * f_ref[...].astype(jnp.float32)
                  ).astype(o_ref.dtype)


@jax.jit
def reverse_attention(sal, feat):
    """(1 - sigmoid(sal)) broadcast over channels, multiplied with features."""
    n, h, w, c = feat.shape
    r = n * h * w
    rp = _round_up(r, 8)
    s = sal.reshape(r, 1).astype(jnp.float32)
    f = feat.reshape(r, c).astype(jnp.bfloat16)
    if rp > r:
        s = jnp.pad(s, ((0, rp - r), (0, 0)))
        f = jnp.pad(f, ((0, rp - r), (0, 0)))
    tr = _pick_tm(rp)
    out = pl.pallas_call(
        _rev_att_kernel,
        out_shape=jax.ShapeDtypeStruct((rp, c), jnp.bfloat16),
        grid_spec=pltpu.PrefetchScalarGridSpec(
            num_scalar_prefetch=0, grid=(rp // tr,),
            in_specs=[pl.BlockSpec((tr, 1), lambda i: (i, 0)),
                      pl.BlockSpec((tr, c), lambda i: (i, 0))],
            out_specs=pl.BlockSpec((tr, c), lambda i: (i, 0))),
        compiler_params=pltpu.CompilerParams(
            dimension_semantics=("parallel",)),
    )(s, f)
    return out[:r].reshape(n, h, w, c)


# ----------------------------------------------------------------------------
# Conv (im2col feeding the Pallas matmul), pooling, resize
# ----------------------------------------------------------------------------
@functools.partial(jax.jit, static_argnames=("k", "stride", "padding",
                                             "dilation", "relu", "res_mode"))
def _conv2d(x, wmat, bias, res, *, k, stride, padding, dilation, relu,
            res_mode):
    # im2col + matmul fused in one jit; the K-alignment pad block is appended
    # to the patch concat (no second full-matrix copy).
    x = x.astype(jnp.bfloat16)
    n, h, w, c = x.shape
    kp, cout = wmat.shape
    ho = (h + 2 * padding - dilation * (k - 1) - 1) // stride + 1
    wo = (w + 2 * padding - dilation * (k - 1) - 1) // stride + 1
    if padding:
        x = jnp.pad(x, ((0, 0), (padding, padding), (padding, padding), (0, 0)))
    cols = []
    for i in range(k):
        for j in range(k):
            sl = x[:,
                   i * dilation: i * dilation + (ho - 1) * stride + 1: stride,
                   j * dilation: j * dilation + (wo - 1) * stride + 1: stride,
                   :]
            cols.append(sl)
    kk = k * k * c
    if kp > kk:
        cols.append(jnp.zeros((n, ho, wo, kp - kk), jnp.bfloat16))
    patches = cols[0] if len(cols) == 1 else jnp.concatenate(cols, axis=-1)
    m = n * ho * wo
    a = patches.reshape(m, kp)
    mp = _round_up(m, 8)
    if mp > m:
        a = jnp.pad(a, ((0, mp - m), (0, 0)))
    r = None
    if res is not None:
        r = res.reshape(m, cout)
        if mp > m:
            r = jnp.pad(r, ((0, mp - m), (0, 0)))
    if cout == 1:
        out = _matvec_head(a, wmat, bias, relu=relu, res=r)
    else:
        out = _matmul_bias(a, wmat, bias, relu=relu, res=r, res_mode=res_mode)
    if mp > m:
        out = out[:m]
    return out.reshape(n, ho, wo, cout)


def conv_p(x, p, k, stride=1, padding=0, dilation=1, relu=False,
           res=None, res_mode="pre_relu"):
    return _conv2d(x, p["wmat"], p["bias"], res, k=k, stride=stride,
                   padding=padding, dilation=dilation, relu=relu,
                   res_mode=res_mode)


def maxpool3x3s2p1(x):
    n, h, w, c = x.shape
    ho = (h + 2 - 3) // 2 + 1
    wo = (w + 2 - 3) // 2 + 1
    xp = jnp.pad(x, ((0, 0), (1, 1), (1, 1), (0, 0)),
                 constant_values=-jnp.inf)
    out = None
    for i in range(3):
        for j in range(3):
            sl = xp[:, i: i + (ho - 1) * 2 + 1: 2,
                       j: j + (wo - 1) * 2 + 1: 2, :]
            out = sl if out is None else jnp.maximum(out, sl)
    return out


def _lin_idx(out_size, in_size):
    if out_size == 1:
        src = jnp.zeros((1,), jnp.float32)
    else:
        src = jnp.arange(out_size, dtype=jnp.float32) * (
            (in_size - 1) / (out_size - 1))
    lo = jnp.floor(src).astype(jnp.int32)
    hi = jnp.minimum(lo + 1, in_size - 1)
    w = src - lo.astype(jnp.float32)
    return lo, hi, w


def interp_bilinear_ac(x, out_h, out_w):
    """F.interpolate(..., mode='bilinear', align_corners=True) in NHWC."""
    n, h, w, c = x.shape
    y0, y1, wy = _lin_idx(out_h, h)
    x0, x1, wx = _lin_idx(out_w, w)
    top = (x[:, y0, :, :] * (1.0 - wy)[None, :, None, None]
           + x[:, y1, :, :] * wy[None, :, None, None])
    out = (top[:, :, x0, :] * (1.0 - wx)[None, None, :, None]
           + top[:, :, x1, :] * wx[None, None, :, None])
    return out


# ----------------------------------------------------------------------------
# Deterministic parameter construction (BN folded, weights pre-reshaped, bf16)
# ----------------------------------------------------------------------------
class KeyGen:
    def __init__(self, seed):
        self.key = jax.random.PRNGKey(seed)

    def __call__(self):
        self.key, sub = jax.random.split(self.key)
        return sub


def _prep_conv(kg, cin, cout, k, bn):
    fan_in = cin * k * k
    w = jax.random.normal(kg(), (k, k, cin, cout), jnp.float32) * math.sqrt(
        2.0 / fan_in)
    if bn:
        # BatchNorm2d (eval, default init: gamma=1, beta=0, mean=0, var=1):
        # scale = 1/sqrt(var+eps) folded directly into the weight columns.
        # TODO(synk): with real pretrained stats the fold must use
        # gamma/sqrt(var+eps) and bias = beta - gamma*mean/sqrt(var+eps).
        w = w * (1.0 / math.sqrt(1.0 + 1e-5))
        bias = jnp.zeros((cout,), jnp.float32)
    else:
        bound = 1.0 / math.sqrt(fan_in)
        bias = jax.random.uniform(kg(), (cout,), jnp.float32, -bound, bound)
    kk = k * k * cin
    kp = kk if kk <= 128 else _round_up(kk, 128)
    wm = w.reshape(kk, cout)
    if kp > kk:
        wm = jnp.pad(wm, ((0, kp - kk), (0, 0)))
    return {"wmat": wm.astype(jnp.bfloat16),
            "bias": bias.reshape(1, cout)}


def conv_bn_p(kg, cin, cout, k):
    return _prep_conv(kg, cin, cout, k, bn=True)


def conv_b_p(kg, cin, cout, k):
    return _prep_conv(kg, cin, cout, k, bn=False)


def make_resnet50_params(kg):
    p = {"conv1": conv_bn_p(kg, 3, 64, 7)}
    cfg = [("layer1", 64, 3), ("layer2", 128, 4),
           ("layer3", 256, 6), ("layer4", 512, 3)]
    cin = 64
    for name, planes, nblocks in cfg:
        blocks = []
        for i in range(nblocks):
            bin_ = cin if i == 0 else planes * 4
            bp = {"c1": conv_bn_p(kg, bin_, planes, 1),
                  "c2": conv_bn_p(kg, planes, planes, 3),
                  "c3": conv_bn_p(kg, planes, planes * 4, 1)}
            if i == 0:
                bp["ds"] = conv_bn_p(kg, cin, planes * 4, 1)
            blocks.append(bp)
        p[name] = blocks
        cin = planes * 4
    return p


ASPP_RATES = (6, 12, 18)


def make_aspp_params(kg):
    # TODO(synk): ASPP class body is not given in the reference; a standard
    # DeepLab-style ASPP (2048 -> 256 branches, rates 6/12/18 + image pool,
    # projection, 1-channel head) is substituted so s_g has the 1-channel
    # shape the rest of the ERRNet forward requires.
    p = {"b0": conv_bn_p(kg, 2048, 256, 1),
         "b1": conv_bn_p(kg, 2048, 256, 3),
         "b2": conv_bn_p(kg, 2048, 256, 3),
         "b3": conv_bn_p(kg, 2048, 256, 3),
         "b4": conv_bn_p(kg, 2048, 256, 1),
         "proj": conv_bn_p(kg, 256 * 5, 256, 1),
         "out": conv_b_p(kg, 256, 1, 1)}
    # Center-tap (1x1) weights of the dilated branches, merged with b0 into a
    # single 2048 -> 1024 matmul. Valid when dilation >= H,W and padding ==
    # dilation (the only taps hitting real pixels are the centers).
    cin = 2048
    center = lambda q: q["wmat"][4 * cin: 5 * cin, :]
    p["b0123_1x1"] = {
        "wmat": jnp.concatenate([p["b0"]["wmat"], center(p["b1"]),
                                 center(p["b2"]), center(p["b3"])], axis=1),
        "bias": jnp.concatenate([p["b0"]["bias"], p["b1"]["bias"],
                                 p["b2"]["bias"], p["b3"]["bias"]], axis=1)}
    return p


def make_sea_params(kg):
    return {"c1h": conv_bn_p(kg, 64, 64, 3), "c2h": conv_bn_p(kg, 64, 64, 3),
            "c3h": conv_bn_p(kg, 64, 64, 3), "c4h": conv_bn_p(kg, 64, 64, 3),
            "c1v": conv_bn_p(kg, 256, 64, 3), "c2v": conv_bn_p(kg, 64, 64, 3),
            "c3v": conv_bn_p(kg, 64, 64, 3), "c4v": conv_bn_p(kg, 64, 64, 3),
            "c5": conv_bn_p(kg, 128, 64, 3),
            "cout": conv_b_p(kg, 64, 1, 1)}


def make_rru_params(kg, feature_channel, intern_channel):
    return {"c1": conv_bn_p(kg, feature_channel + 64, intern_channel, 3),
            "c2": conv_bn_p(kg, intern_channel, intern_channel, 3),
            "c3": conv_bn_p(kg, intern_channel, intern_channel, 3),
            "out": conv_b_p(kg, intern_channel, 1, 3)}


# ----------------------------------------------------------------------------
# Module forwards
# ----------------------------------------------------------------------------
def bottleneck_forward(p, x, stride):
    out = conv_p(x, p["c1"], 1, relu=True)
    out = conv_p(out, p["c2"], 3, stride=stride, padding=1, relu=True)
    if "ds" in p:
        identity = conv_p(x, p["ds"], 1, stride=stride, relu=False)
    else:
        identity = x
    # relu(conv3(out) + identity) fused into the conv3 epilogue (f32 acc).
    return conv_p(out, p["c3"], 1, relu=True, res=identity,
                  res_mode="pre_relu")


def run_layer(blocks, x, stride):
    for i, bp in enumerate(blocks):
        x = bottleneck_forward(bp, x, stride if i == 0 else 1)
    return x


def resnet50_forward(p, x):
    x = conv_p(x, p["conv1"], 7, stride=2, padding=3, relu=True)
    x0 = maxpool3x3s2p1(x)
    x1 = run_layer(p["layer1"], x0, 1)
    x2 = run_layer(p["layer2"], x1, 2)
    x3 = run_layer(p["layer3"], x2, 2)
    x4 = run_layer(p["layer4"], x3, 2)
    return x0, x1, x2, x3, x4


def aspp_forward(p, x):
    n, h, w, _ = x.shape
    if h <= min(ASPP_RATES) and w <= min(ASPP_RATES):
        # Dilated 3x3 with padding==dilation>=H,W == its center 1x1 tap;
        # b0..b3 share the same input -> one merged 2048->1024 matmul.
        merged = conv_p(x, p["b0123_1x1"], 1, relu=True)
        gp = jnp.mean(x, axis=(1, 2), keepdims=True)
        b4 = conv_p(gp, p["b4"], 1, relu=True)
        b4 = jnp.broadcast_to(b4, (n, h, w, b4.shape[-1]))
        cat = jnp.concatenate([merged, b4], axis=-1)
    else:
        b0 = conv_p(x, p["b0"], 1, relu=True)
        b1 = conv_p(x, p["b1"], 3, padding=6, dilation=6, relu=True)
        b2 = conv_p(x, p["b2"], 3, padding=12, dilation=12, relu=True)
        b3 = conv_p(x, p["b3"], 3, padding=18, dilation=18, relu=True)
        gp = jnp.mean(x, axis=(1, 2), keepdims=True)
        b4 = conv_p(gp, p["b4"], 1, relu=True)
        b4 = jnp.broadcast_to(b4, (n, h, w, b4.shape[-1]))
        cat = jnp.concatenate([b0, b1, b2, b3, b4], axis=-1)
    proj = conv_p(cat, p["proj"], 1, relu=True)
    return conv_p(proj, p["out"], 1, relu=False)


def sea_forward(p, left, down):
    # down and left have the same spatial size in ERRNet (x1 vs x0), so the
    # interpolate branch of SEA.forward is not taken.
    out1h = conv_p(left, p["c1h"], 3, padding=1, relu=True)
    out2h = conv_p(out1h, p["c2h"], 3, padding=1, relu=True)
    out1v = conv_p(down, p["c1v"], 3, padding=1, relu=True)
    # fuse = relu(conv2v(out1v)) * out2h, fused into the conv2v epilogue.
    fuse = conv_p(out1v, p["c2v"], 3, padding=1, relu=True,
                  res=out2h, res_mode="mul")
    # relu(conv3h(fuse)) + out1h / relu(conv3v(fuse)) + out1v, fused.
    out3h = conv_p(fuse, p["c3h"], 3, padding=1, relu=True,
                   res=out1h, res_mode="post")
    out4h = conv_p(out3h, p["c4h"], 3, padding=1, relu=True)
    out3v = conv_p(fuse, p["c3v"], 3, padding=1, relu=True,
                   res=out1v, res_mode="post")
    out4v = conv_p(out3v, p["c4v"], 3, padding=1, relu=True)
    edge_feature = conv_p(jnp.concatenate([out4h, out4v], axis=-1),
                          p["c5"], 3, padding=1, relu=False)
    edge_out = conv_p(edge_feature, p["cout"], 1, relu=False)
    return edge_feature, edge_out


def rru_forward(p, features, cam_guidance, edge_guidance):
    n, h, w, _ = features.shape
    crop_sal = interp_bilinear_ac(cam_guidance, h, w)
    crop_edge = interp_bilinear_ac(edge_guidance, h, w).astype(jnp.bfloat16)
    x_sal = reverse_attention(crop_sal, features)           # Pallas VPU kernel
    x = jnp.concatenate([x_sal, crop_edge], axis=-1)
    x = conv_p(x, p["c1"], 3, padding=1, relu=False)         # BasicConv2d (no relu)
    x = conv_p(x, p["c2"], 3, padding=1, relu=True)           # F.relu(conv)
    x = conv_p(x, p["c3"], 3, padding=1, relu=True)
    # ra_out conv + `+ crop_sal` fused into the 1-channel head (f32).
    x = conv_p(x, p["out"], 3, padding=1, relu=False,
               res=crop_sal.astype(jnp.float32))
    return x


def errnet_forward(params, x_nchw):
    x = jnp.transpose(x_nchw, (0, 2, 3, 1))                  # NCHW -> NHWC
    x0, x1, x2, x3, x4 = resnet50_forward(params["resnet"], x)

    s_g = aspp_forward(params["aspp"], x4)
    cam_out_g = interp_bilinear_ac(s_g, s_g.shape[1] * 32, s_g.shape[2] * 32)

    e_g, e_g_out = sea_forward(params["sea"], x0, x1)
    e_g_out = interp_bilinear_ac(e_g_out, e_g_out.shape[1] * 4,
                                 e_g_out.shape[2] * 4)

    s_4 = rru_forward(params["rru4"], x4, s_g, e_g)
    cam_out_4 = interp_bilinear_ac(s_4, s_4.shape[1] * 32, s_4.shape[2] * 32)

    s_3 = rru_forward(params["rru3"], x3, s_4 + s_g, e_g)
    cam_out_3 = interp_bilinear_ac(s_3, s_3.shape[1] * 16, s_3.shape[2] * 16)

    s_g_up2 = interp_bilinear_ac(s_g, s_g.shape[1] * 2, s_g.shape[2] * 2)
    s_2 = rru_forward(params["rru2"], x2, s_3 + s_g_up2, e_g)
    cam_out_2 = interp_bilinear_ac(s_2, s_2.shape[1] * 8, s_2.shape[2] * 8)

    to_nchw = lambda t: jnp.transpose(t.astype(jnp.float32), (0, 3, 1, 2))
    return tuple(to_nchw(t) for t in
                 (cam_out_g, cam_out_4, cam_out_3, cam_out_2, e_g_out))


# ----------------------------------------------------------------------------
if __name__ == "__main__":
    kg = KeyGen(1)
    params = {
        "resnet": make_resnet50_params(kg),
        "aspp": make_aspp_params(kg),
        "sea": make_sea_params(kg),
        "rru4": make_rru_params(kg, 2048, 256),
        "rru3": make_rru_params(kg, 1024, 64),
        "rru2": make_rru_params(kg, 512, 64),
    }
    # TODO(synk): resnet50(pretrained=True) checkpoint weights are replaced by
    # deterministic He-initialized weights (no file / network access allowed).
    x = jax.random.normal(jax.random.PRNGKey(0), (2, 3, 64, 64), jnp.float32)
    outs = errnet_forward(params, x)
    outs = jax.block_until_ready(outs)
    expected = [(2, 1, 64, 64)] * 5
    assert [tuple(o.shape) for o in outs] == expected, \
        [tuple(o.shape) for o in outs]
    print("KERNEL_OK")
</pallas_src>

<mosaic_0001>
module attributes {stable_mosaic.version = 11 : i64} {
  func.func @_mm_kernel_1k(%arg0: i32, %arg1: i32, %arg2: memref<256x256xbf16, #tpu.memory_space<vmem>>, %arg3: memref<256x64xbf16, #tpu.memory_space<vmem>>, %arg4: memref<1x64xf32, #tpu.memory_space<vmem>>, %arg5: memref<256x64xbf16, #tpu.memory_space<vmem>>) attributes {dimension_semantics = [#tpu.dimension_semantics<parallel>, #tpu.dimension_semantics<parallel>], iteration_bounds = array<i64: 8, 1>, scalar_prefetch = 0 : i64, scratch_operands = 0 : i64, tpu.core_type = #tpu.core_type<tc>, window_params = [{transform_indices = @transform_0, window_bounds = array<i64: 256, 256>}, {transform_indices = @transform_1, window_bounds = array<i64: 256, 64>}, {transform_indices = @transform_2, window_bounds = array<i64: 1, 64>}, {transform_indices = @transform_3, window_bounds = array<i64: 256, 64>}]} {
    %c0 = arith.constant 0 : index
    %c0_0 = arith.constant 0 : index
    %0 = vector.load %arg2[%c0, %c0_0] : memref<256x256xbf16, #tpu.memory_space<vmem>>, vector<256x256xbf16>
    %c0_1 = arith.constant 0 : index
    %c0_2 = arith.constant 0 : index
    %1 = vector.load %arg3[%c0_1, %c0_2] : memref<256x64xbf16, #tpu.memory_space<vmem>>, vector<256x64xbf16>
    %cst = arith.constant dense<0.000000e+00> : vector<256x64xf32>
    %2 = tpu.matmul %0, %1, %cst {dimension_numbers = #tpu.dot_dimension_numbers<[1], [0], [0], [1], [0, 0, 1, 1], [], []>} : vector<256x256xbf16>, vector<256x64xbf16>, vector<256x64xf32> -> vector<256x64xf32>
    %c0_3 = arith.constant 0 : index
    %c0_4 = arith.constant 0 : index
    %3 = vector.load %arg4[%c0_3, %c0_4] : memref<1x64xf32, #tpu.memory_space<vmem>>, vector<1x64xf32>
    %4 = vector.broadcast %3 : vector<1x64xf32> to vector<256x64xf32>
    %5 = arith.addf %2, %4 : vector<256x64xf32>
    %cst_5 = arith.constant 0.000000e+00 : f32
    %6 = vector.broadcast %cst_5 : f32 to vector<256x64xf32>
    %7 = arith.maximumf %5, %6 : vector<256x64xf32>
    %8 = arith.truncf %7 : vector<256x64xf32> to vector<256x64xbf16>
    %c0_6 = arith.constant 0 : index
    %c0_7 = arith.constant 0 : index
    %9 = vector.load %arg5[%c0_6, %c0_7] : memref<256x64xbf16, #tpu.memory_space<vmem>>, vector<256x64xbf16>
    tpu.vector_store %arg5[%c0_6, %c0_7], %8 {strides = array<i32>} : memref<256x64xbf16, #tpu.memory_space<vmem>>, vector<256x64xbf16>,
    return
  }
  func.func @transform_0(%arg0: i32, %arg1: i32) -> (i32, i32) {
    %c0_i32 = arith.constant 0 : i32
    %c0_i32_0 = arith.constant 0 : i32
    return %arg0, %c0_i32 : i32, i32
  }
  func.func @transform_1(%arg0: i32, %arg1: i32) -> (i32, i32) {
    %c0_i32 = arith.constant 0 : i32
    %c0_i32_0 = arith.constant 0 : i32
    return %c0_i32, %arg1 : i32, i32
  }
  func.func @transform_2(%arg0: i32, %arg1: i32) -> (i32, i32) {
    %c0_i32 = arith.constant 0 : i32
    %c0_i32_0 = arith.constant 0 : i32
    return %c0_i32, %arg1 : i32, i32
  }
  func.func @transform_3(%arg0: i32, %arg1: i32) -> (i32, i32) {
    %c0_i32 = arith.constant 0 : i32
    return %arg0, %arg1 : i32, i32
  }
}

</mosaic_0001>

<llo_original>
// kernel: _conv2d.1
$region0: #{_conv2d.1}
  #allocation0 [shape = 'u32[]', space=smem, size = 0x4, offset = 0x4, fixed_abs, tag = 'smem constant byte address 0x4 - core index']
  #allocation1 [shape = 'u32[144,128]{1,0:T(1,128)}', space=vmem, size = 0x12000, scoped, tag = 'internal scratch']
  %s0 = inlined_call_operand.vmem [shape: bf16[2048,256], index: 0, kind: input, shape index: {}]
  %s1 = inlined_call_operand.vmem [shape: bf16[256,64], index: 1, kind: input, shape index: {}]
  %s2 = inlined_call_operand.vmem [shape: f32[1,64], index: 2, kind: input, shape index: {}]
  %s3 = inlined_call_operand.hbm [shape: bf16[2048,64], index: 3, kind: output, shape index: {}]
  %s4 = sld [smem:[#allocation0]]
  $region45: #{_conv2d.1} parent=0
    _
  %s6 = ssub.s32 1, %s4
  %s7 = scalar_select 0, %s6, %s4
  $region1: #{_conv2d.1} parent=0
    #allocation2 [shape = 'u8[131072]{0}', space=vmem, size = 0x20000, scoped, tag = 'output window, operand 0']
    #allocation3 [shape = 's32[2]{0}', space=sflag, size = 0x8, scoped, tag = 'scoped memory for _conv2d.1']
    %8 = vsyncpa [#allocation3], 0
    %s9 = scalar_lea.sflag [#allocation3], 1
    %10 = vsyncpa %s9, 0
    loop: start=0, step=1, limit=10
    $region2: #{_conv2d.1} parent=1 // loop_pre_header
      _
    $region3: #{_conv2d.1} parent=1 // loop_header
      %s12 = sphi 0, %s16
      %p13 = scmp.ge.s32.totalorder %s12, 10
      %s19 = sphi 0, %s31
      %s20 = sphi 0, %s27
      %s21 = sphi 0, %s19
      %s22 = sphi 0, %s20
      %s23 = sphi 0, %s21
      %s24 = sphi 0, %s22
      %s34 = sphi 0, %s36
      %s37 = sphi 0, %s34
      %s38 = sphi 0, %s37
      %s54 = sphi 0, %s38
      %s60 = sphi 0, %s62
      %s63 = sphi 0, %s60
      %s64 = sphi 0, %s63
      %s80 = sphi 0, %s64
      %s86 = sphi 0, %s88
      %s89 = sphi 0, %s86
      %s90 = sphi 0, %s89
      %s106 = sphi 0, %s90
      %s114 = sphi 0, %s116
      %s117 = sphi 0, %s114
      %s118 = sphi 0, %s117
      %s134 = sphi 0, %s118
    $region4: #{_conv2d.1} parent=1 // loop_header_branch
      %15 = sbr.rel (%p13) target = $region8
    $region5: #{_conv2d.1} parent=1 // loop_body
      %s17 = ssub.s32 %s12, 1
      %s18 = ssub.s32 %s12, 2
      %s25 = sadd.s32 1, %s20
      %p26 = scmp.ge.s32.totalorder %s25, 1
      %s27 = scalar_select %p26, 0, %s25
      %s28 = sadd.s32 1, %s19
      %s29 = scalar_select %p26, %s28, %s19
      %p30 = scmp.ge.s32.totalorder %s29, 8
      %s31 = scalar_select %p30, 0, %s29
      %s32 = ssub.s32 %s19, %s31
      %p33 = scmp.eq.s32.totalorder %s32, 0
      %s35 = sadd.s32 %s34, 1
      %s36 = scalar_select %p33, %s34, %s35
      %p39 = pneg %p33
      %p40 = scmp.eq.s32.totalorder %s12, 7
      %p41 = por %p39, %p40
      %p42 = scmp.ne.s32.totalorder %s34, %s37
      %p43 = scmp.eq.s32.totalorder %s12, 0
      %p44 = por %p42, %p43
      %p45 = scmp.ne.s32.totalorder %s34, %s37
      %p46 = scmp.eq.s32.totalorder %s17, 7
      %p47 = por %p45, %p46
      %p48 = scmp.ne.s32.totalorder %s37, %s38
      %p49 = scmp.eq.s32.totalorder %s17, 0
      %p50 = por %p48, %p49
      %p51 = scmp.ne.s32.totalorder %s37, %s38
      %p52 = scmp.eq.s32.totalorder %s18, 7
      %p53 = por %p51, %p52
      %p55 = scmp.ne.s32.totalorder %s38, %s54
      %p56 = scmp.eq.s32.totalorder %s18, 0
      %p57 = por %p55, %p56
      %s58 = ssub.s32 %s20, %s27
      %p59 = scmp.eq.s32.totalorder %s58, 0
      %s61 = sadd.s32 %s60, 1
      %s62 = scalar_select %p59, %s60, %s61
      %p65 = pneg %p59
      %p66 = scmp.eq.s32.totalorder %s12, 7
      %p67 = por %p65, %p66
      %p68 = scmp.ne.s32.totalorder %s60, %s63
      %p69 = scmp.eq.s32.totalorder %s12, 0
      %p70 = por %p68, %p69
      %p71 = scmp.ne.s32.totalorder %s60, %s63
      %p72 = scmp.eq.s32.totalorder %s17, 7
      %p73 = por %p71, %p72
      %p74 = scmp.ne.s32.totalorder %s63, %s64
      %p75 = scmp.eq.s32.totalorder %s17, 0
      %p76 = por %p74, %p75
      %p77 = scmp.ne.s32.totalorder %s63, %s64
      %p78 = scmp.eq.s32.totalorder %s18, 7
      %p79 = por %p77, %p78
      %p81 = scmp.ne.s32.totalorder %s64, %s80
      %p82 = scmp.eq.s32.totalorder %s18, 0
      %p83 = por %p81, %p82
      %s84 = ssub.s32 %s20, %s27
      %p85 = scmp.eq.s32.totalorder %s84, 0
      %s87 = sadd.s32 %s86, 1
      %s88 = scalar_select %p85, %s86, %s87
      %p91 = pneg %p85
      %p92 = scmp.eq.s32.totalorder %s12, 7
      %p93 = por %p91, %p92
      %p94 = scmp.ne.s32.totalorder %s86, %s89
      %p95 = scmp.eq.s32.totalorder %s12, 0
      %p96 = por %p94, %p95
      %p97 = scmp.ne.s32.totalorder %s86, %s89
      %p98 = scmp.eq.s32.totalorder %s17, 7
      %p99 = por %p97, %p98
      %p100 = scmp.ne.s32.totalorder %s89, %s90
      %p101 = scmp.eq.s32.totalorder %s17, 0
      %p102 = por %p100, %p101
      %p103 = scmp.ne.s32.totalorder %s89, %s90
      %p104 = scmp.eq.s32.totalorder %s18, 7
      %p105 = por %p103, %p104
      %p107 = scmp.ne.s32.totalorder %s90, %s106
      %p108 = scmp.eq.s32.totalorder %s18, 0
      %p109 = por %p107, %p108
      %s110 = ssub.s32 %s19, %s31
      %s111 = ssub.s32 %s20, %s27
      %s112 = sor.u32 %s110, %s111
      %p113 = scmp.eq.s32.totalorder %s112, 0
      %s115 = sadd.s32 %s114, 1
      %s116 = scalar_select %p113, %s114, %s115
      %p119 = pneg %p113
      %p120 = scmp.eq.s32.totalorder %s12, 7
      %p121 = por %p119, %p120
      %p122 = scmp.ne.s32.totalorder %s114, %s117
      %p123 = scmp.eq.s32.totalorder %s12, 0
      %p124 = por %p122, %p123
      %p125 = scmp.ne.s32.totalorder %s114, %s117
      %p126 = scmp.eq.s32.totalorder %s17, 7
      %p127 = por %p125, %p126
      %p128 = scmp.ne.s32.totalorder %s117, %s118
      %p129 = scmp.eq.s32.totalorder %s17, 0
      %p130 = por %p128, %p129
      %p131 = scmp.ne.s32.totalorder %s117, %s118
      %p132 = scmp.eq.s32.totalorder %s18, 7
      %p133 = por %p131, %p132
      %p135 = scmp.ne.s32.totalorder %s118, %s134
      %p136 = scmp.eq.s32.totalorder %s18, 0
      %p137 = por %p135, %p136
      %p138 = scmp.le.s32.totalorder 1, %s12
      %p139 = scmp.lt.s32.totalorder %s12, 9
      %p140 = pnand %p138, %p139
      %p141 = pneg %p140
      // Predicated region
      $region9: #{_conv2d.1} parent=5 // pred_check
        _
      $region10: #{_conv2d.1} parent=5 // pred_check_branch
        %143 = sbr.rel (%p140) target = $region12
      $region11: #{_conv2d.1} parent=5 // pred_region
        %s144 = ssub.s32 %s12, 1
        // Predicated region
        $region13: #{_conv2d.1} parent=11 // pred_check
          %p145 = pneg %p76
        $region14: #{_conv2d.1} parent=11 // pred_check_branch
          %147 = sbr.rel (%p145) target = $region16
        $region15: #{_conv2d.1} parent=11 // pred_region
          %p148 = scmp.lt.s32.totalorder %s22, 0
          %s149 = scalar_select %p148, %s22, 0
          %s150 = smul.addr %s149, 4
          %s151 = scalar_lea.vmem %s1, %s150
        $region16: #{_conv2d.1} parent=11 // pred_fallthru
          _
        // Predicated region
        $region17: #{_conv2d.1} parent=11 // pred_check
          %p152 = pneg %p102
        $region18: #{_conv2d.1} parent=11 // pred_check_branch
          %154 = sbr.rel (%p152) target = $region20
        $region19: #{_conv2d.1} parent=11 // pred_region
          %p155 = scmp.lt.s32.totalorder %s22, 0
          %s156 = scalar_select %p155, %s22, 0
          %s157 = scalar_lea.vmem %s2, %s156
        $region20: #{_conv2d.1} parent=11 // pred_fallthru
          _
      $region12: #{_conv2d.1} parent=5 // pred_fallthru
        _
      %p158 = scmp.lt.s32.totalorder %s12, 8
      // Predicated region
      $region21: #{_conv2d.1} parent=5 // pred_check
        %p159 = pneg %p158
      $region22: #{_conv2d.1} parent=5 // pred_check_branch
        %161 = sbr.rel (%p159) target = $region24
      $region23: #{_conv2d.1} parent=5 // pred_region
        // Predicated region
        $region25: #{_conv2d.1} parent=23 // pred_check
          %p162 = pneg %p44
        $region26: #{_conv2d.1} parent=23 // pred_check_branch
          %164 = sbr.rel (%p162) target = $region28
        $region27: #{_conv2d.1} parent=23 // pred_region
          %s165 = smul.u32 32, %s19
          %p166 = scmp.lt.s32.totalorder %s165, 255
          %s167 = scalar_select %p166, %s165, 255
          %s168 = smul.addr %s167, 2
          %s169 = smul.addr %s168, 4
          %s170 = scalar_lea.vmem %s0, %s169
          %s171 = smul.u32 32, %s19
        $region28: #{_conv2d.1} parent=23 // pred_fallthru
          _
      $region24: #{_conv2d.1} parent=5 // pred_fallthru
        _
      %p172 = scmp.le.s32.totalorder 1, %s12
      %p173 = scmp.lt.s32.totalorder %s12, 9
      %p174 = pnand %p172, %p173
      %p175 = pneg %p174
      // Predicated region
      $region29: #{_conv2d.1} parent=5 // pred_check
        _
      $region30: #{_conv2d.1} parent=5 // pred_check_branch
        %177 = sbr.rel (%p174) target = $region32
      $region31: #{_conv2d.1} parent=5 // pred_region
        %s178 = ssub.s32 %s12, 1
        %s179 = smul.u32 32, %s21
        %p180 = scmp.lt.s32.totalorder %s179, 255
        %s181 = scalar_select %p180, %s179, 255
        %s182 = smul.addr %s181, 2
        %s183 = smul.addr %s182, 4
        %s184 = scalar_lea.vmem %s0, %s183
        %p185 = pneg %p50
        %p186 = pneg %p47
        %p187 = scmp.lt.s32.totalorder %s22, 0
        %s188 = scalar_select %p187, %s22, 0
        %s189 = smul.addr %s188, 4
        %s190 = scalar_lea.vmem %s1, %s189
        %p191 = pneg %p76
        %p192 = pneg %p73
        %p193 = scmp.lt.s32.totalorder %s22, 0
        %s194 = scalar_select %p193, %s22, 0
        %s195 = scalar_lea.vmem %s2, %s194
        %p196 = pneg %p102
        %p197 = pneg %p99
        %p198 = pneg %p130
        %p199 = pneg %p127
        %s200 = sand.u32 %s117, 1
        %s201 = scalar_lea.sflag [#allocation3], %s200
        %s202 = sand.u32 %s117, 1
        %s203 = smul.addr %s202, 128
        %s204 = scalar_lea.vmem [#allocation2], %s203
        %s205 = smul.u32 32, %s21
        %p206 = scmp.lt.s32.totalorder %s205, 255
        %s207 = scalar_select %p206, %s205, 255
        %s208 = smul.addr %s207, 2
        %s209 = smul.addr %s208, 4
        %s210 = scalar_lea.vmem %s0, %s209
        %s211 = smul.u32 32, %s21
        %p212 = scmp.lt.s32.totalorder %s22, 0
        %s213 = scalar_select %p212, %s22, 0
        %s214 = smul.addr %s213, 4
        %s215 = scalar_lea.vmem %s1, %s214
        %p216 = scmp.lt.s32.totalorder %s22, 0
        %s217 = scalar_select %p216, %s22, 0
        %s218 = scalar_lea.vmem %s2, %s217
        %s219 = smul.u32 32, %s21
        %v221 = vld [vmem:[%s210] sm:$0xff]
        %v222 = vld [vmem:[%s210 + $0x8] sm:$0xff]
        %v223 = vld [vmem:[%s210 + $0x10] sm:$0xff]
        %v224 = vld [vmem:[%s210 + $0x18] sm:$0xff]
        %v225 = vld [vmem:[%s210 + $0x20] sm:$0xff]
        %v226 = vld [vmem:[%s210 + $0x28] sm:$0xff]
        %v227 = vld [vmem:[%s210 + $0x30] sm:$0xff]
        %v228 = vld [vmem:[%s210 + $0x38] sm:$0xff]
        %v229 = vld [vmem:[%s210 + $0x40] sm:$0xff]
        %v230 = vld [vmem:[%s210 + $0x48] sm:$0xff]
        %v231 = vld [vmem:[%s210 + $0x50] sm:$0xff]
        %v232 = vld [vmem:[%s210 + $0x58] sm:$0xff]
        %v233 = vld [vmem:[%s210 + $0x60] sm:$0xff]
        %v234 = vld [vmem:[%s210 + $0x68] sm:$0xff]
        %v235 = vld [vmem:[%s210 + $0x70] sm:$0xff]
        %v236 = vld [vmem:[%s210 + $0x78] sm:$0xff]
        %v237 = vld [vmem:[%s210 + $0x80] sm:$0xff]
        %v238 = vld [vmem:[%s210 + $0x88] sm:$0xff]
        %v239 = vld [vmem:[%s210 + $0x90] sm:$0xff]
        %v240 = vld [vmem:[%s210 + $0x98] sm:$0xff]
        %v241 = vld [vmem:[%s210 + $0xa0] sm:$0xff]
        %v242 = vld [vmem:[%s210 + $0xa8] sm:$0xff]
        %v243 = vld [vmem:[%s210 + $0xb0] sm:$0xff]
        %v244 = vld [vmem:[%s210 + $0xb8] sm:$0xff]
        %v245 = vld [vmem:[%s210 + $0xc0] sm:$0xff]
        %v246 = vld [vmem:[%s210 + $0xc8] sm:$0xff]
        %v247 = vld [vmem:[%s210 + $0xd0] sm:$0xff]
        %v248 = vld [vmem:[%s210 + $0xd8] sm:$0xff]
        %v249 = vld [vmem:[%s210 + $0xe0] sm:$0xff]
        %v250 = vld [vmem:[%s210 + $0xe8] sm:$0xff]
        %v251 = vld [vmem:[%s210 + $0xf0] sm:$0xff]
        %v252 = vld [vmem:[%s210 + $0xf8] sm:$0xff]
        %v253 = vld [vmem:[%s215] sm:$0xf]
        %v254 = vld [vmem:[%s215 + $0x4] sm:$0xf]
        %v255 = vld [vmem:[%s215 + $0x8] sm:$0xf]
        %v256 = vld [vmem:[%s215 + $0xc] sm:$0xf]
        %v257 = vld [vmem:[%s215 + $0x10] sm:$0xf]
        %v258 = vld [vmem:[%s215 + $0x14] sm:$0xf]
        %v259 = vld [vmem:[%s215 + $0x18] sm:$0xf]
        %v260 = vld [vmem:[%s215 + $0x1c] sm:$0xf]
        %v261 = vld [vmem:[%s215 + $0x20] sm:$0xf]
        %v262 = vld [vmem:[%s215 + $0x24] sm:$0xf]
        %v263 = vld [vmem:[%s215 + $0x28] sm:$0xf]
        %v264 = vld [vmem:[%s215 + $0x2c] sm:$0xf]
        %v265 = vld [vmem:[%s215 + $0x30] sm:$0xf]
        %v266 = vld [vmem:[%s215 + $0x34] sm:$0xf]
        %v267 = vld [vmem:[%s215 + $0x38] sm:$0xf]
        %v268 = vld [vmem:[%s215 + $0x3c] sm:$0xf]
        %v269 = vld [vmem:[%s215 + $0x40] sm:$0xf]
        %v270 = vld [vmem:[%s215 + $0x44] sm:$0xf]
        %v271 = vld [vmem:[%s215 + $0x48] sm:$0xf]
        %v272 = vld [vmem:[%s215 + $0x4c] sm:$0xf]
        %v273 = vld [vmem:[%s215 + $0x50] sm:$0xf]
        %v274 = vld [vmem:[%s215 + $0x54] sm:$0xf]
        %v275 = vld [vmem:[%s215 + $0x58] sm:$0xf]
        %v276 = vld [vmem:[%s215 + $0x5c] sm:$0xf]
        %v277 = vld [vmem:[%s215 + $0x60] sm:$0xf]
        %v278 = vld [vmem:[%s215 + $0x64] sm:$0xf]
        %v279 = vld [vmem:[%s215 + $0x68] sm:$0xf]
        %v280 = vld [vmem:[%s215 + $0x6c] sm:$0xf]
        %v281 = vld [vmem:[%s215 + $0x70] sm:$0xf]
        %v282 = vld [vmem:[%s215 + $0x74] sm:$0xf]
        %v283 = vld [vmem:[%s215 + $0x78] sm:$0xf]
        %v284 = vld [vmem:[%s215 + $0x7c] sm:$0xf]
        %v285 = vld [vmem:[%s218] sm:$0x1]
        %v287 = vlaneseq
        %v288 = vshrl.u32 %v287, 7
        %v289 = vsub.s32 0, %v288
        %v290 = vrot.slane %v285, %v289
        %v324 = vunpack.c.l.b16 %v221
        %v325 = vunpack.c.h.b16 %v221
        %v326 = vunpack.c.l.b16 %v222
        %v327 = vunpack.c.h.b16 %v222
        %v328 = vunpack.c.l.b16 %v223
        %v329 = vunpack.c.h.b16 %v223
        %v330 = vunpack.c.l.b16 %v224
        %v331 = vunpack.c.h.b16 %v224
        %v332 = vunpack.c.l.b16 %v225
        %v333 = vunpack.c.h.b16 %v225
        %v334 = vunpack.c.l.b16 %v226
        %v335 = vunpack.c.h.b16 %v226
        %v336 = vunpack.c.l.b16 %v227
        %v337 = vunpack.c.h.b16 %v227
        %v338 = vunpack.c.l.b16 %v228
        %v339 = vunpack.c.h.b16 %v228
        %v340 = vunpack.c.l.b16 %v229
        %v341 = vunpack.c.h.b16 %v229
        %v342 = vunpack.c.l.b16 %v230
        %v343 = vunpack.c.h.b16 %v230
        %v344 = vunpack.c.l.b16 %v231
        %v345 = vunpack.c.h.b16 %v231
        %v346 = vunpack.c.l.b16 %v232
        %v347 = vunpack.c.h.b16 %v232
        %v348 = vunpack.c.l.b16 %v233
        %v349 = vunpack.c.h.b16 %v233
        %v350 = vunpack.c.l.b16 %v234
        %v351 = vunpack.c.h.b16 %v234
        %v352 = vunpack.c.l.b16 %v235
        %v353 = vunpack.c.h.b16 %v235
        %v354 = vunpack.c.l.b16 %v236
        %v355 = vunpack.c.h.b16 %v236
        %v356 = vunpack.c.l.b16 %v237
        %v357 = vunpack.c.h.b16 %v237
        %v358 = vunpack.c.l.b16 %v238
        %v359 = vunpack.c.h.b16 %v238
        %v360 = vunpack.c.l.b16 %v239
        %v361 = vunpack.c.h.b16 %v239
        %v362 = vunpack.c.l.b16 %v240
        %v363 = vunpack.c.h.b16 %v240
        %v364 = vunpack.c.l.b16 %v241
        %v365 = vunpack.c.h.b16 %v241
        %v366 = vunpack.c.l.b16 %v242
        %v367 = vunpack.c.h.b16 %v242
        %v368 = vunpack.c.l.b16 %v243
        %v369 = vunpack.c.h.b16 %v243
        %v370 = vunpack.c.l.b16 %v244
        %v371 = vunpack.c.h.b16 %v244
        %v372 = vunpack.c.l.b16 %v245
        %v373 = vunpack.c.h.b16 %v245
        %v374 = vunpack.c.l.b16 %v246
        %v375 = vunpack.c.h.b16 %v246
        %v376 = vunpack.c.l.b16 %v247
        %v377 = vunpack.c.h.b16 %v247
        %v378 = vunpack.c.l.b16 %v248
        %v379 = vunpack.c.h.b16 %v248
        %v380 = vunpack.c.l.b16 %v249
        %v381 = vunpack.c.h.b16 %v249
        %v382 = vunpack.c.l.b16 %v250
        %v383 = vunpack.c.h.b16 %v250
        %v384 = vunpack.c.l.b16 %v251
        %v385 = vunpack.c.h.b16 %v251
        %v386 = vunpack.c.l.b16 %v252
        %v387 = vunpack.c.h.b16 %v252
        %v388 = vpack.c.b16 %v326, %v324
        %v389 = vpack.c.b16 %v327, %v325
        %v390 = vpack.c.b16 %v330, %v328
        %v391 = vpack.c.b16 %v331, %v329
        %v392 = vpack.c.b16 %v334, %v332
        %v393 = vpack.c.b16 %v335, %v333
        %v394 = vpack.c.b16 %v338, %v336
        %v395 = vpack.c.b16 %v339, %v337
        %v396 = vpack.c.b16 %v342, %v340
        %v397 = vpack.c.b16 %v343, %v341
        %v398 = vpack.c.b16 %v346, %v344
        %v399 = vpack.c.b16 %v347, %v345
        %v400 = vpack.c.b16 %v350, %v348
        %v401 = vpack.c.b16 %v351, %v349
        %v402 = vpack.c.b16 %v354, %v352
        %v403 = vpack.c.b16 %v355, %v353
        %v404 = vpack.c.b16 %v358, %v356
        %v405 = vpack.c.b16 %v359, %v357
        %v406 = vpack.c.b16 %v362, %v360
        %v407 = vpack.c.b16 %v363, %v361
        %v408 = vpack.c.b16 %v366, %v364
        %v409 = vpack.c.b16 %v367, %v365
        %v410 = vpack.c.b16 %v370, %v368
        %v411 = vpack.c.b16 %v371, %v369
        %v412 = vpack.c.b16 %v374, %v372
        %v413 = vpack.c.b16 %v375, %v373
        %v414 = vpack.c.b16 %v378, %v376
        %v415 = vpack.c.b16 %v379, %v377
        %v416 = vpack.c.b16 %v382, %v380
        %v417 = vpack.c.b16 %v383, %v381
        %v418 = vpack.c.b16 %v386, %v384
        %v419 = vpack.c.b16 %v387, %v385
        %v484 = vunpack.c.l.b16 %v253
        %v485 = vunpack.c.l.b16 %v254
        %v486 = vunpack.c.l.b16 %v255
        %v487 = vunpack.c.l.b16 %v256
        %v488 = vunpack.c.l.b16 %v257
        %v489 = vunpack.c.l.b16 %v258
        %v490 = vunpack.c.l.b16 %v259
        %v491 = vunpack.c.l.b16 %v260
        %v492 = vunpack.c.l.b16 %v261
        %v493 = vunpack.c.l.b16 %v262
        %v494 = vunpack.c.l.b16 %v263
        %v495 = vunpack.c.l.b16 %v264
        %v496 = vunpack.c.l.b16 %v265
        %v497 = vunpack.c.l.b16 %v266
        %v498 = vunpack.c.l.b16 %v267
        %v499 = vunpack.c.l.b16 %v268
        %v500 = vunpack.c.l.b16 %v269
        %v501 = vunpack.c.l.b16 %v270
        %v502 = vunpack.c.l.b16 %v271
        %v503 = vunpack.c.l.b16 %v272
        %v504 = vunpack.c.l.b16 %v273
        %v505 = vunpack.c.l.b16 %v274
        %v506 = vunpack.c.l.b16 %v275
        %v507 = vunpack.c.l.b16 %v276
        %v508 = vunpack.c.l.b16 %v277
        %v509 = vunpack.c.l.b16 %v278
        %v510 = vunpack.c.l.b16 %v279
        %v511 = vunpack.c.l.b16 %v280
        %v512 = vunpack.c.l.b16 %v281
        %v513 = vunpack.c.l.b16 %v282
        %v514 = vunpack.c.l.b16 %v283
        %v515 = vunpack.c.l.b16 %v284
        %v516 = vpack.c.b16 %v485, %v484
        %v517 = vpack.c.b16 %v487, %v486
        %v518 = vpack.c.b16 %v489, %v488
        %v519 = vpack.c.b16 %v491, %v490
        %v520 = vpack.c.b16 %v493, %v492
        %v521 = vpack.c.b16 %v495, %v494
        %v522 = vpack.c.b16 %v497, %v496
        %v523 = vpack.c.b16 %v499, %v498
        %v524 = vpack.c.b16 %v501, %v500
        %v525 = vpack.c.b16 %v503, %v502
        %v526 = vpack.c.b16 %v505, %v504
        %v527 = vpack.c.b16 %v507, %v506
        %v528 = vpack.c.b16 %v509, %v508
        %v529 = vpack.c.b16 %v511, %v510
        %v530 = vpack.c.b16 %v513, %v512
        %v531 = vpack.c.b16 %v515, %v514
        %548 = vmatprep.subr.bf16.mxu0 0
        %549 = vmatpush1.bf16.msra.mxu0 %v516
        %550 = vmatprep.subr.bf16.mxu0 0
        %551 = vmatpush1.bf16.msra.mxu0 %v517
        %552 = vmatprep.subr.bf16.mxu0 0
        %553 = vmatpush1.bf16.msra.mxu0 %v518
        %554 = vmatprep.subr.bf16.mxu0 0
        %555 = vmatpush1.bf16.msra.mxu0 %v519
        %556 = vmatprep.subr.bf16.mxu0 0
        %557 = vmatpush1.bf16.msra.mxu0 %v520
        %558 = vmatprep.subr.bf16.mxu0 0
        %559 = vmatpush1.bf16.msra.mxu0 %v521
        %560 = vmatprep.subr.bf16.mxu0 0
        %561 = vmatpush1.bf16.msra.mxu0 %v522
        %562 = vmatprep.subr.bf16.mxu0 0
        %563 = vmatpush1.bf16.msra.mxu0 %v523
        %564 = vmatprep.subr.bf16.mxu0 0
        %565 = vmatpush1.bf16.msra.mxu0 %v524
        %566 = vmatprep.subr.bf16.mxu0 0
        %567 = vmatpush1.bf16.msra.mxu0 %v525
        %568 = vmatprep.subr.bf16.mxu0 0
        %569 = vmatpush1.bf16.msra.mxu0 %v526
        %570 = vmatprep.subr.bf16.mxu0 0
        %571 = vmatpush1.bf16.msra.mxu0 %v527
        %572 = vmatprep.subr.bf16.mxu0 0
        %573 = vmatpush1.bf16.msra.mxu0 %v528
        %574 = vmatprep.subr.bf16.mxu0 0
        %575 = vmatpush1.bf16.msra.mxu0 %v529
        %576 = vmatprep.subr.bf16.mxu0 0
        %577 = vmatpush1.bf16.msra.mxu0 %v530
        %578 = vmatprep.subr.bf16.mxu0 0
        %579 = vmatpush1.bf16.msra.mxu0 %v531
        %580 = vmatprep.mubr.bf16.mxu0 %v389
        %581 = vmatmul.mubr.bf16.gmra.mrb[0].mxu0 %v388
        %v582 = vpop.f32.mrb[0].mxu0
        %v583 = vadd.f32 %v290, %v582
        %v584 = vpop.f32.mrb[0].mxu0
        %v585 = vpop.f32.mrb[0].mxu0
        %v586 = vadd.f32 %v290, %v585
        %v587 = vpop.f32.mrb[0].mxu0
        %588 = vmatprep.mubr.bf16.mxu0 %v391
        %589 = vmatmul.mubr.bf16.gmra.mrb[0].mxu0 %v390
        %v590 = vpop.f32.mrb[0].mxu0
        %v591 = vadd.f32 %v290, %v590
        %v592 = vpop.f32.mrb[0].mxu0
        %v593 = vpop.f32.mrb[0].mxu0
        %v594 = vadd.f32 %v290, %v593
        %v595 = vpop.f32.mrb[0].mxu0
        %596 = vmatprep.mubr.bf16.mxu0 %v393
        %597 = vmatmul.mubr.bf16.gmra.mrb[0].mxu0 %v392
        %v598 = vpop.f32.mrb[0].mxu0
        %v599 = vadd.f32 %v290, %v598
        %v600 = vpop.f32.mrb[0].mxu0
        %v601 = vpop.f32.mrb[0].mxu0
        %v602 = vadd.f32 %v290, %v601
        %v603 = vpop.f32.mrb[0].mxu0
        %604 = vmatprep.mubr.bf16.mxu0 %v395
        %605 = vmatmul.mubr.bf16.gmra.mrb[0].mxu0 %v394
        %v606 = vpop.f32.mrb[0].mxu0
        %v607 = vadd.f32 %v290, %v606
        %v608 = vpop.f32.mrb[0].mxu0
        %v609 = vpop.f32.mrb[0].mxu0
        %v610 = vadd.f32 %v290, %v609
        %v611 = vpop.f32.mrb[0].mxu0
        %612 = vmatprep.mubr.bf16.mxu0 %v397
        %613 = vmatmul.mubr.bf16.gmra.mrb[0].mxu0 %v396
        %v614 = vpop.f32.mrb[0].mxu0
        %v615 = vadd.f32 %v290, %v614
        %v616 = vpop.f32.mrb[0].mxu0
        %v617 = vpop.f32.mrb[0].mxu0
        %v618 = vadd.f32 %v290, %v617
        %v619 = vpop.f32.mrb[0].mxu0
        %620 = vmatprep.mubr.bf16.mxu0 %v399
        %621 = vmatmul.mubr.bf16.gmra.mrb[0].mxu0 %v398
        %v622 = vpop.f32.mrb[0].mxu0
        %v623 = vadd.f32 %v290, %v622
        %v624 = vpop.f32.mrb[0].mxu0
        %v625 = vpop.f32.mrb[0].mxu0
        %v626 = vadd.f32 %v290, %v625
        %v627 = vpop.f32.mrb[0].mxu0
        %628 = vmatprep.mubr.bf16.mxu0 %v401
        %629 = vmatmul.mubr.bf16.gmra.mrb[0].mxu0 %v400
        %v630 = vpop.f32.mrb[0].mxu0
        %v631 = vadd.f32 %v290, %v630
        %v632 = vpop.f32.mrb[0].mxu0
        %v633 = vpop.f32.mrb[0].mxu0
        %v634 = vadd.f32 %v290, %v633
        %v635 = vpop.f32.mrb[0].mxu0
        %636 = vmatprep.mubr.bf16.mxu0 %v403
        %637 = vmatmul.mubr.bf16.gmra.mrb[0].mxu0 %v402
        %v638 = vpop.f32.mrb[0].mxu0
        %v639 = vadd.f32 %v290, %v638
        %v640 = vpop.f32.mrb[0].mxu0
        %v641 = vpop.f32.mrb[0].mxu0
        %v642 = vadd.f32 %v290, %v641
        %v643 = vpop.f32.mrb[0].mxu0
        %644 = vmatprep.mubr.bf16.mxu0 %v405
        %645 = vmatmul.mubr.bf16.gmra.mrb[0].mxu0 %v404
        %v646 = vpop.f32.mrb[0].mxu0
        %v647 = vadd.f32 %v290, %v646
        %v648 = vpop.f32.mrb[0].mxu0
        %v649 = vpop.f32.mrb[0].mxu0
        %v650 = vadd.f32 %v290, %v649
        %v651 = vpop.f32.mrb[0].mxu0
        %652 = vmatprep.mubr.bf16.mxu0 %v407
        %653 = vmatmul.mubr.bf16.gmra.mrb[0].mxu0 %v406
        %v654 = vpop.f32.mrb[0].mxu0
        %v655 = vadd.f32 %v290, %v654
        %v656 = vpop.f32.mrb[0].mxu0
        %v657 = vpop.f32.mrb[0].mxu0
        %v658 = vadd.f32 %v290, %v657
        %v659 = vpop.f32.mrb[0].mxu0
        %660 = vmatprep.mubr.bf16.mxu0 %v409
        %661 = vmatmul.mubr.bf16.gmra.mrb[0].mxu0 %v408
        %v662 = vpop.f32.mrb[0].mxu0
        %v663 = vadd.f32 %v290, %v662
        %v664 = vpop.f32.mrb[0].mxu0
        %v665 = vpop.f32.mrb[0].mxu0
        %v666 = vadd.f32 %v290, %v665
        %v667 = vpop.f32.mrb[0].mxu0
        %668 = vmatprep.mubr.bf16.mxu0 %v411
        %669 = vmatmul.mubr.bf16.gmra.mrb[0].mxu0 %v410
        %v670 = vpop.f32.mrb[0].mxu0
        %v671 = vadd.f32 %v290, %v670
        %v672 = vpop.f32.mrb[0].mxu0
        %v673 = vpop.f32.mrb[0].mxu0
        %v674 = vadd.f32 %v290, %v673
        %v675 = vpop.f32.mrb[0].mxu0
        %676 = vmatprep.mubr.bf16.mxu0 %v413
        %677 = vmatmul.mubr.bf16.gmra.mrb[0].mxu0 %v412
        %v678 = vpop.f32.mrb[0].mxu0
        %v679 = vadd.f32 %v290, %v678
        %v680 = vpop.f32.mrb[0].mxu0
        %v681 = vpop.f32.mrb[0].mxu0
        %v682 = vadd.f32 %v290, %v681
        %v683 = vpop.f32.mrb[0].mxu0
        %684 = vmatprep.mubr.bf16.mxu0 %v415
        %685 = vmatmul.mubr.bf16.gmra.mrb[0].mxu0 %v414
        %v686 = vpop.f32.mrb[0].mxu0
        %v687 = vadd.f32 %v290, %v686
        %v688 = vpop.f32.mrb[0].mxu0
        %v689 = vpop.f32.mrb[0].mxu0
        %v690 = vadd.f32 %v290, %v689
        %v691 = vpop.f32.mrb[0].mxu0
        %692 = vmatprep.mubr.bf16.mxu0 %v417
        %693 = vmatmul.mubr.bf16.gmra.mrb[0].mxu0 %v416
        %v694 = vpop.f32.mrb[0].mxu0
        %v695 = vadd.f32 %v290, %v694
        %v696 = vpop.f32.mrb[0].mxu0
        %v697 = vpop.f32.mrb[0].mxu0
        %v698 = vadd.f32 %v290, %v697
        %v699 = vpop.f32.mrb[0].mxu0
        %700 = vmatprep.mubr.bf16.mxu0 %v419
        %701 = vmatmul.mubr.bf16.gmra.mrb[0].mxu0 %v418
        %v702 = vpop.f32.mrb[0].mxu0
        %v703 = vadd.f32 %v290, %v702
        %v704 = vpop.f32.mrb[0].mxu0
        %v705 = vpop.f32.mrb[0].mxu0
        %v706 = vadd.f32 %v290, %v705
        %v707 = vpop.f32.mrb[0].mxu0
        %708 = vdwg.mxu0
        %v709 = vmax.f32 %v583, 0.0
        %v710 = vmax.f32 %v586, 0.0
        %v711 = vmax.f32 %v591, 0.0
        %v712 = vmax.f32 %v594, 0.0
        %v713 = vmax.f32 %v599, 0.0
        %v714 = vmax.f32 %v602, 0.0
        %v715 = vmax.f32 %v607, 0.0
        %v716 = vmax.f32 %v610, 0.0
        %v717 = vmax.f32 %v615, 0.0
        %v718 = vmax.f32 %v618, 0.0
        %v719 = vmax.f32 %v623, 0.0
        %v720 = vmax.f32 %v626, 0.0
        %v721 = vmax.f32 %v631, 0.0
        %v722 = vmax.f32 %v634, 0.0
        %v723 = vmax.f32 %v639, 0.0
        %v724 = vmax.f32 %v642, 0.0
        %v725 = vmax.f32 %v647, 0.0
        %v726 = vmax.f32 %v650, 0.0
        %v727 = vmax.f32 %v655, 0.0
        %v728 = vmax.f32 %v658, 0.0
        %v729 = vmax.f32 %v663, 0.0
        %v730 = vmax.f32 %v666, 0.0
        %v731 = vmax.f32 %v671, 0.0
        %v732 = vmax.f32 %v674, 0.0
        %v733 = vmax.f32 %v679, 0.0
        %v734 = vmax.f32 %v682, 0.0
        %v735 = vmax.f32 %v687, 0.0
        %v736 = vmax.f32 %v690, 0.0
        %v737 = vmax.f32 %v695, 0.0
        %v738 = vmax.f32 %v698, 0.0
        %v739 = vmax.f32 %v703, 0.0
        %v740 = vmax.f32 %v706, 0.0
        %v741 = vpack.c.bf16 %v710, %v709
        %v742 = vpack.c.bf16 %v712, %v711
        %v743 = vpack.c.bf16 %v714, %v713
        %v744 = vpack.c.bf16 %v716, %v715
        %v745 = vpack.c.bf16 %v718, %v717
        %v746 = vpack.c.bf16 %v720, %v719
        %v747 = vpack.c.bf16 %v722, %v721
        %v748 = vpack.c.bf16 %v724, %v723
        %v749 = vpack.c.bf16 %v726, %v725
        %v750 = vpack.c.bf16 %v728, %v727
        %v751 = vpack.c.bf16 %v730, %v729
        %v752 = vpack.c.bf16 %v732, %v731
        %v753 = vpack.c.bf16 %v734, %v733
        %v754 = vpack.c.bf16 %v736, %v735
        %v755 = vpack.c.bf16 %v738, %v737
        %v756 = vpack.c.bf16 %v740, %v739
        %v773 = vunpack.c.l.b16 %v741
        %v774 = vunpack.c.h.b16 %v741
        %v775 = vunpack.c.l.b16 %v742
        %v776 = vunpack.c.h.b16 %v742
        %v777 = vunpack.c.l.b16 %v743
        %v778 = vunpack.c.h.b16 %v743
        %v779 = vunpack.c.l.b16 %v744
        %v780 = vunpack.c.h.b16 %v744
        %v781 = vunpack.c.l.b16 %v745
        %v782 = vunpack.c.h.b16 %v745
        %v783 = vunpack.c.l.b16 %v746
        %v784 = vunpack.c.h.b16 %v746
        %v785 = vunpack.c.l.b16 %v747
        %v786 = vunpack.c.h.b16 %v747
        %v787 = vunpack.c.l.b16 %v748
        %v788 = vunpack.c.h.b16 %v748
        %v789 = vunpack.c.l.b16 %v749
        %v790 = vunpack.c.h.b16 %v749
        %v791 = vunpack.c.l.b16 %v750
        %v792 = vunpack.c.h.b16 %v750
        %v793 = vunpack.c.l.b16 %v751
        %v794 = vunpack.c.h.b16 %v751
        %v795 = vunpack.c.l.b16 %v752
        %v796 = vunpack.c.h.b16 %v752
        %v797 = vunpack.c.l.b16 %v753
        %v798 = vunpack.c.h.b16 %v753
        %v799 = vunpack.c.l.b16 %v754
        %v800 = vunpack.c.h.b16 %v754
        %v801 = vunpack.c.l.b16 %v755
        %v802 = vunpack.c.h.b16 %v755
        %v803 = vunpack.c.l.b16 %v756
        %v804 = vunpack.c.h.b16 %v756
        %v805 = vpack.c.b16 %v773, %v773
        %v806 = vpack.c.b16 %v774, %v774
        %v807 = vpack.c.b16 %v775, %v775
        %v808 = vpack.c.b16 %v776, %v776
        %v809 = vpack.c.b16 %v777, %v777
        %v810 = vpack.c.b16 %v778, %v778
        %v811 = vpack.c.b16 %v779, %v779
        %v812 = vpack.c.b16 %v780, %v780
        %v813 = vpack.c.b16 %v781, %v781
        %v814 = vpack.c.b16 %v782, %v782
        %v815 = vpack.c.b16 %v783, %v783
        %v816 = vpack.c.b16 %v784, %v784
        %v817 = vpack.c.b16 %v785, %v785
        %v818 = vpack.c.b16 %v786, %v786
        %v819 = vpack.c.b16 %v787, %v787
        %v820 = vpack.c.b16 %v788, %v788
        %v821 = vpack.c.b16 %v789, %v789
        %v822 = vpack.c.b16 %v790, %v790
        %v823 = vpack.c.b16 %v791, %v791
        %v824 = vpack.c.b16 %v792, %v792
        %v825 = vpack.c.b16 %v793, %v793
        %v826 = vpack.c.b16 %v794, %v794
        %v827 = vpack.c.b16 %v795, %v795
        %v828 = vpack.c.b16 %v796, %v796
        %v829 = vpack.c.b16 %v797, %v797
        %v830 = vpack.c.b16 %v798, %v798
        %v831 = vpack.c.b16 %v799, %v799
        %v832 = vpack.c.b16 %v800, %v800
        %v833 = vpack.c.b16 %v801, %v801
        %v834 = vpack.c.b16 %v802, %v802
        %v835 = vpack.c.b16 %v803, %v803
        %v836 = vpack.c.b16 %v804, %v804
        %vm869 = vcmask 519168
        %870 = vst.msk [vmem:[%s204] sm:$0xf] %vm869, %v805
        %871 = vst.msk [vmem:[%s204 + $0x4] sm:$0xf] %vm869, %v806
        %872 = vst.msk [vmem:[%s204 + $0x8] sm:$0xf] %vm869, %v807
        %873 = vst.msk [vmem:[%s204 + $0xc] sm:$0xf] %vm869, %v808
        %874 = vst.msk [vmem:[%s204 + $0x10] sm:$0xf] %vm869, %v809
        %875 = vst.msk [vmem:[%s204 + $0x14] sm:$0xf] %vm869, %v810
        %876 = vst.msk [vmem:[%s204 + $0x18] sm:$0xf] %vm869, %v811
        %877 = vst.msk [vmem:[%s204 + $0x1c] sm:$0xf] %vm869, %v812
        %878 = vst.msk [vmem:[%s204 + $0x20] sm:$0xf] %vm869, %v813
        %879 = vst.msk [vmem:[%s204 + $0x24] sm:$0xf] %vm869, %v814
        %880 = vst.msk [vmem:[%s204 + $0x28] sm:$0xf] %vm869, %v815
        %881 = vst.msk [vmem:[%s204 + $0x2c] sm:$0xf] %vm869, %v816
        %882 = vst.msk [vmem:[%s204 + $0x30] sm:$0xf] %vm869, %v817
        %883 = vst.msk [vmem:[%s204 + $0x34] sm:$0xf] %vm869, %v818
        %884 = vst.msk [vmem:[%s204 + $0x38] sm:$0xf] %vm869, %v819
        %885 = vst.msk [vmem:[%s204 + $0x3c] sm:$0xf] %vm869, %v820
        %886 = vst.msk [vmem:[%s204 + $0x40] sm:$0xf] %vm869, %v821
        %887 = vst.msk [vmem:[%s204 + $0x44] sm:$0xf] %vm869, %v822
        %888 = vst.msk [vmem:[%s204 + $0x48] sm:$0xf] %vm869, %v823
        %889 = vst.msk [vmem:[%s204 + $0x4c] sm:$0xf] %vm869, %v824
        %890 = vst.msk [vmem:[%s204 + $0x50] sm:$0xf] %vm869, %v825
        %891 = vst.msk [vmem:[%s204 + $0x54] sm:$0xf] %vm869, %v826
        %892 = vst.msk [vmem:[%s204 + $0x58] sm:$0xf] %vm869, %v827
        %893 = vst.msk [vmem:[%s204 + $0x5c] sm:$0xf] %vm869, %v828
        %894 = vst.msk [vmem:[%s204 + $0x60] sm:$0xf] %vm869, %v829
        %895 = vst.msk [vmem:[%s204 + $0x64] sm:$0xf] %vm869, %v830
        %896 = vst.msk [vmem:[%s204 + $0x68] sm:$0xf] %vm869, %v831
        %897 = vst.msk [vmem:[%s204 + $0x6c] sm:$0xf] %vm869, %v832
        %898 = vst.msk [vmem:[%s204 + $0x70] sm:$0xf] %vm869, %v833
        %899 = vst.msk [vmem:[%s204 + $0x74] sm:$0xf] %vm869, %v834
        %900 = vst.msk [vmem:[%s204 + $0x78] sm:$0xf] %vm869, %v835
        %901 = vst.msk [vmem:[%s204 + $0x7c] sm:$0xf] %vm869, %v836
        %s902 = sand.u32 %s117, 1
        %s903 = scalar_lea.sflag [#allocation3], %s902
        %s904 = sand.u32 %s117, 1
        %s905 = smul.addr %s904, 128
        %s906 = scalar_lea.vmem [#allocation2], %s905
        // Predicated region
        $region33: #{_conv2d.1} parent=31 // pred_check
          %p907 = pneg %p127
        $region34: #{_conv2d.1} parent=31 // pred_check_branch
          %909 = sbr.rel (%p907) target = $region36
        $region35: #{_conv2d.1} parent=31 // pred_region
          %s910 = smul.u32 32, %s21
          %s912 = ssub.s32 2048, 2048
          %913 = vsyncadd %s903, %s912
          %s914 = sadd.s32 %s22, %s910
          %s915 = smul.addr %s914, 64
          %s916 = scalar_lea.hbm %s3, %s915
          %s917 = sshll.u32 %s906, 4
          %s918 = int_to_ptr.vmem [resolvable:$true] %s917
          %923 = dma.vmem_to_hbm [thread:$0]  %s918, 2048, %s916, %s903, 64, 64, 4
        $region36: #{_conv2d.1} parent=31 // pred_fallthru
          _
      $region32: #{_conv2d.1} parent=5 // pred_fallthru
        _
      %p924 = scmp.le.s32.totalorder 2, %s12
      // Predicated region
      $region37: #{_conv2d.1} parent=5 // pred_check
        %p925 = pneg %p924
      $region38: #{_conv2d.1} parent=5 // pred_check_branch
        %927 = sbr.rel (%p925) target = $region40
      $region39: #{_conv2d.1} parent=5 // pred_region
        %s928 = ssub.s32 %s12, 2
        // Predicated region
        $region41: #{_conv2d.1} parent=39 // pred_check
          %p929 = pneg %p133
        $region42: #{_conv2d.1} parent=39 // pred_check_branch
          %931 = sbr.rel (%p929) target = $region44
        $region43: #{_conv2d.1} parent=39 // pred_region
          %s932 = sand.u32 %s118, 1
          %s933 = scalar_lea.sflag [#allocation3], %s932
          %s934 = sand.u32 %s118, 1
          %s935 = smul.addr %s934, 128
          %s936 = scalar_lea.vmem [#allocation2], %s935
          %937 = dma.done %s933, 2048
        $region44: #{_conv2d.1} parent=39 // pred_fallthru
          _
      $region40: #{_conv2d.1} parent=5 // pred_fallthru
        _
    $region6: #{_conv2d.1} parent=1 // loop_footer
      %s16 = sadd.s32 1, %s12
    $region7: #{_conv2d.1} parent=1 // loop_footer_branch
      %11 = sbr.rel target = $region3
    $region8: #{_conv2d.1} parent=1 // loop_exit
      _
    %938 = vsyncpa [#allocation3], 1
    %s939 = scalar_lea.sflag [#allocation3], 1
    %940 = vsyncpa %s939, 1

</llo_original>
